<compile_context>
chip_gen: v7x
topology: tpu7x:2x2x1
jax: 0.10.0
libtpu: 0.0.40
codegen_flags: <defaults>
</compile_context>

<pallas_src>
import functools

import jax
import jax.numpy as jnp
from jax.experimental import pallas as pl
from jax.experimental.pallas import tpu as pltpu


def _round_up(x, m):
    return ((x + m - 1) // m) * m


def gru_recurrence_kernel(gi_ref, h0_ref, whh_ref, bhh_ref,
                          out_ref, hn_ref, h_scr, *, seq_len, t_blk):
    """One grid step = one block of `t_blk` timesteps of the GRU recurrence.

    gi_ref : (t_blk, Bp, 3*Hp)  precomputed x_t @ W_ih^T + b_ih
    h0_ref : (Bp, Hp)           initial hidden state
    whh_ref: (Hp, 3*Hp)         W_hh^T (gate blocks lane-aligned)
    bhh_ref: (1, 3*Hp)          b_hh
    out_ref: (t_blk, Bp, Hp)    per-timestep hidden states (output block)
    hn_ref : (Bp, Hp)           final hidden state (written on last block)
    h_scr  : (Bp, Hp) f32 VMEM  hidden state carried across grid steps
    """
    tb = pl.program_id(0)
    Bp, Hp = h0_ref.shape

    @pl.when(tb == 0)
    def _():
        h_scr[...] = h0_ref[...].astype(jnp.float32)

    # Hoisted out of the time loop: weight load + bias broadcast.
    whh = whh_ref[...]
    bhh = jnp.broadcast_to(bhh_ref[...], (Bp, 3 * Hp))

    # Number of valid timesteps in this block (handles S not divisible by t_blk).
    n_valid = jnp.minimum(t_blk, seq_len - tb * t_blk)

    def step(t, h):
        gi = gi_ref[t]                                            # (Bp, 3Hp)
        gh = jnp.dot(h, whh, preferred_element_type=jnp.float32) + bhh
        # PyTorch gate order: r, z, n — each slice starts on a 128-lane boundary.
        r = jax.nn.sigmoid(gi[:, 0:Hp] + gh[:, 0:Hp])
        z = jax.nn.sigmoid(gi[:, Hp:2 * Hp] + gh[:, Hp:2 * Hp])
        n = jnp.tanh(gi[:, 2 * Hp:3 * Hp] + r * gh[:, 2 * Hp:3 * Hp])
        h_new = (1.0 - z) * n + z * h
        out_ref[t] = h_new.astype(out_ref.dtype)
        return h_new

    h_final = jax.lax.fori_loop(0, n_valid, step, h_scr[...])
    h_scr[...] = h_final

    @pl.when(tb == pl.num_programs(0) - 1)
    def _():
        hn_ref[...] = h_final.astype(hn_ref.dtype)


def gru_forward(gi_sbg, h0_bh, w_hh_t_p, b_hh_p, *, seq_len, t_blk):
    """gi_sbg: (Sp, Bp, 3Hp); h0_bh: (Bp, Hp); w_hh_t_p: (Hp, 3Hp); b_hh_p: (1, 3Hp).
    Returns (output (Sp, Bp, Hp), h_n (Bp, Hp))."""
    Sp, Bp, G = gi_sbg.shape
    Hp = h0_bh.shape[-1]
    assert G == 3 * Hp and Sp % t_blk == 0
    num_blocks = Sp // t_blk

    kernel = functools.partial(gru_recurrence_kernel,
                               seq_len=seq_len, t_blk=t_blk)

    out, h_n = pl.pallas_call(
        kernel,
        out_shape=(
            jax.ShapeDtypeStruct((Sp, Bp, Hp), jnp.float32),
            jax.ShapeDtypeStruct((Bp, Hp), jnp.float32),
        ),
        grid_spec=pltpu.PrefetchScalarGridSpec(
            num_scalar_prefetch=0,
            grid=(num_blocks,),
            in_specs=[
                pl.BlockSpec((t_blk, Bp, G), lambda tb: (tb, 0, 0)),   # gi block
                pl.BlockSpec((Bp, Hp), lambda tb: (0, 0)),             # h0
                pl.BlockSpec((Hp, G), lambda tb: (0, 0)),              # W_hh^T
                pl.BlockSpec((1, G), lambda tb: (0, 0)),               # b_hh
            ],
            out_specs=[
                pl.BlockSpec((t_blk, Bp, Hp), lambda tb: (tb, 0, 0)),  # output
                pl.BlockSpec((Bp, Hp), lambda tb: (0, 0)),             # h_n
            ],
            scratch_shapes=[pltpu.VMEM((Bp, Hp), jnp.float32)],
        ),
        compiler_params=pltpu.CompilerParams(
            dimension_semantics=("arbitrary",),   # recurrence is serial in time
        ),
    )(gi_sbg, h0_bh, w_hh_t_p, b_hh_p)
    return out, h_n


class EncoderPallas:
    """JAX/Pallas equivalent of the PyTorch Encoder module (num_layers=1)."""

    def __init__(self, vocab_size, embed_size, hidden_size, key, t_blk=128):
        self.num_layers = 1
        self.hidden_size = hidden_size
        self.embed_size = embed_size
        self.t_blk = t_blk
        H = hidden_size
        self.Hp = _round_up(H, 128)          # lane-aligned padded hidden size

        k1, k2, k3, k4, k5 = jax.random.split(key, 5)
        scale = 1.0 / jnp.sqrt(hidden_size)
        # nn.Embedding default init ~ N(0, 1).
        self.embedding = jax.random.normal(
            k1, (vocab_size, embed_size), dtype=jnp.float32)
        # PyTorch-shaped GRU params: weight_ih (3H, E), weight_hh (3H, H).
        self.w_ih = jax.random.uniform(k2, (3 * H, embed_size),
                                       minval=-scale, maxval=scale,
                                       dtype=jnp.float32)
        self.w_hh = jax.random.uniform(k3, (3 * H, H),
                                       minval=-scale, maxval=scale,
                                       dtype=jnp.float32)
        self.b_ih = jax.random.uniform(k4, (3 * H,), minval=-scale,
                                       maxval=scale, dtype=jnp.float32)
        self.b_hh = jax.random.uniform(k5, (3 * H,), minval=-scale,
                                       maxval=scale, dtype=jnp.float32)

        # Pre-transposed, gate-block-padded versions: each of the r/z/n gate
        # blocks starts at a multiple of 128 lanes; padded entries are zero.
        # TODO(synk): for large E/H, cast these to bf16 (with f32 accumulation)
        # to halve VMEM/DMA and double MXU rate; kept f32 here to match the
        # f32 PyTorch reference bit-for-bit semantics.
        Hp = self.Hp
        w_ih_t_p = jnp.zeros((embed_size, 3 * Hp), jnp.float32)
        w_hh_t_p = jnp.zeros((Hp, 3 * Hp), jnp.float32)
        b_ih_p = jnp.zeros((1, 3 * Hp), jnp.float32)
        b_hh_p = jnp.zeros((1, 3 * Hp), jnp.float32)
        for g in range(3):
            w_ih_t_p = w_ih_t_p.at[:, g * Hp:g * Hp + H].set(
                self.w_ih[g * H:(g + 1) * H, :].T)
            w_hh_t_p = w_hh_t_p.at[:H, g * Hp:g * Hp + H].set(
                self.w_hh[g * H:(g + 1) * H, :].T)
            b_ih_p = b_ih_p.at[0, g * Hp:g * Hp + H].set(
                self.b_ih[g * H:(g + 1) * H])
            b_hh_p = b_hh_p.at[0, g * Hp:g * Hp + H].set(
                self.b_hh[g * H:(g + 1) * H])
        self.w_ih_t_p, self.w_hh_t_p = w_ih_t_p, w_hh_t_p
        self.b_ih_p, self.b_hh_p = b_ih_p, b_hh_p

    def init_hidden(self, batch_size):
        return jnp.zeros((self.num_layers, batch_size, self.hidden_size),
                         dtype=jnp.float32)

    def __call__(self, inputs, hidden):
        # inputs: (B, S) int32 token ids; hidden: (1, B, H)
        B, S = inputs.shape
        H, Hp = self.hidden_size, self.Hp
        Bp = _round_up(B, 8)
        t_blk = min(self.t_blk, S)
        Sp = _round_up(S, t_blk)

        # Embedding gather (glue; data-dependent row gather stays in XLA).
        emb = jnp.take(self.embedding, inputs, axis=0)           # (B, S, E)

        # Input projection for ALL timesteps as one large matmul, emitted
        # directly in seq-first (S, B, 3Hp) layout (no separate HBM transpose).
        gi = jnp.einsum('bse,eg->sbg', emb, self.w_ih_t_p,
                        preferred_element_type=jnp.float32) + self.b_ih_p

        # Pad batch / time to TPU-friendly sizes (zeros; sliced off below).
        gi = jnp.pad(gi, ((0, Sp - S), (0, Bp - B), (0, 0)))
        h0 = jnp.pad(hidden[0], ((0, Bp - B), (0, Hp - H)))

        out_p, hn_p = gru_forward(gi, h0, self.w_hh_t_p, self.b_hh_p,
                                  seq_len=S, t_blk=t_blk)

        output = out_p[:S, :B, :H]                               # (S, B, H)
        h_n = hn_p[:B, :H][None]                                 # (1, B, H)
        return output, h_n


def _reference_gru(x_sbe, h0_bh, w_ih, w_hh, b_ih, b_hh):
    """Pure-JAX reference of the PyTorch GRU recurrence (unpadded params)."""
    H = h0_bh.shape[-1]

    def step(h, x):
        gi = x @ w_ih.T + b_ih
        gh = h @ w_hh.T + b_hh
        r = jax.nn.sigmoid(gi[:, :H] + gh[:, :H])
        z = jax.nn.sigmoid(gi[:, H:2 * H] + gh[:, H:2 * H])
        n = jnp.tanh(gi[:, 2 * H:] + r * gh[:, 2 * H:])
        h_new = (1 - z) * n + z * h
        return h_new, h_new

    h_n, out = jax.lax.scan(step, h0_bh, x_sbe)
    return out, h_n


if __name__ == "__main__":
    vocab_size, embed_size, hidden_size = 50, 32, 32
    batch, seq = 2, 8

    key = jax.random.PRNGKey(0)
    k_params, k_inputs = jax.random.split(key)

    enc = EncoderPallas(vocab_size, embed_size, hidden_size, k_params)
    inputs = jax.random.randint(k_inputs, (batch, seq), 0, vocab_size,
                                dtype=jnp.int32)
    hidden = enc.init_hidden(batch)

    output, h_n = enc(inputs, hidden)
    output = jax.block_until_ready(output)
    h_n = jax.block_until_ready(h_n)

    # Sanity-check against a pure-JAX reference of the same recurrence.
    emb = jnp.transpose(jnp.take(enc.embedding, inputs, axis=0), (1, 0, 2))
    ref_out, ref_hn = _reference_gru(emb, hidden[0], enc.w_ih, enc.w_hh,
                                     enc.b_ih, enc.b_hh)
    assert output.shape == (seq, batch, hidden_size)
    assert h_n.shape == (1, batch, hidden_size)
    assert jnp.allclose(output, ref_out, atol=1e-4, rtol=1e-4)
    assert jnp.allclose(h_n[0], ref_hn, atol=1e-4, rtol=1e-4)

    print("KERNEL_OK")
</pallas_src>

<mosaic_0001>
module attributes {stable_mosaic.version = 11 : i64} {
  func.func @gru_recurrence_kernel(%arg0: i32, %arg1: memref<8x8x384xf32, #tpu.memory_space<vmem>>, %arg2: memref<8x128xf32, #tpu.memory_space<vmem>>, %arg3: memref<128x384xf32, #tpu.memory_space<vmem>>, %arg4: memref<1x384xf32, #tpu.memory_space<vmem>>, %arg5: memref<8x8x128xf32, #tpu.memory_space<vmem>>, %arg6: memref<8x128xf32, #tpu.memory_space<vmem>>, %arg7: memref<8x128xf32, #tpu.memory_space<vmem>>) attributes {dimension_semantics = [#tpu.dimension_semantics<arbitrary>], iteration_bounds = array<i64: 1>, scalar_prefetch = 0 : i64, scratch_operands = 1 : i64, tpu.core_type = #tpu.core_type<tc>, window_params = [{transform_indices = @transform_0, window_bounds = array<i64: 8, 8, 384>}, {pipeline_mode = #tpu.pipeline_mode<synchronous>, transform_indices = @transform_1, window_bounds = array<i64: 8, 128>}, {pipeline_mode = #tpu.pipeline_mode<synchronous>, transform_indices = @transform_2, window_bounds = array<i64: 128, 384>}, {pipeline_mode = #tpu.pipeline_mode<synchronous>, transform_indices = @transform_3, window_bounds = array<i64: 1, 384>}, {transform_indices = @transform_4, window_bounds = array<i64: 8, 8, 128>}, {pipeline_mode = #tpu.pipeline_mode<synchronous>, transform_indices = @transform_5, window_bounds = array<i64: 8, 128>}]} {
    %c0_i32 = arith.constant 0 : i32
    %0 = arith.cmpi eq, %arg0, %c0_i32 : i32
    %1 = arith.extui %0 : i1 to i32
    %c0_i32_0 = arith.constant 0 : i32
    %2 = arith.cmpi ne, %1, %c0_i32_0 : i32
    scf.if %2 {
      %c0_13 = arith.constant 0 : index
      %c0_14 = arith.constant 0 : index
      %18 = vector.load %arg2[%c0_13, %c0_14] : memref<8x128xf32, #tpu.memory_space<vmem>>, vector<8x128xf32>
      %c0_15 = arith.constant 0 : index
      %c0_16 = arith.constant 0 : index
      %19 = vector.load %arg7[%c0_15, %c0_16] : memref<8x128xf32, #tpu.memory_space<vmem>>, vector<8x128xf32>
      tpu.vector_store %arg7[%c0_15, %c0_16], %18 {strides = array<i32>} : memref<8x128xf32, #tpu.memory_space<vmem>>, vector<8x128xf32>,
    } else {
    }
    %c0 = arith.constant 0 : index
    %c0_1 = arith.constant 0 : index
    %3 = vector.load %arg3[%c0, %c0_1] : memref<128x384xf32, #tpu.memory_space<vmem>>, vector<128x384xf32>
    %c0_2 = arith.constant 0 : index
    %c0_3 = arith.constant 0 : index
    %4 = vector.load %arg4[%c0_2, %c0_3] : memref<1x384xf32, #tpu.memory_space<vmem>>, vector<1x384xf32>
    %5 = vector.shape_cast %4 : vector<1x384xf32> to vector<1x384xf32>
    %6 = vector.broadcast %5 : vector<1x384xf32> to vector<8x384xf32>
    %c8_i32 = arith.constant 8 : i32
    %7 = arith.muli %arg0, %c8_i32 : i32
    %c8_i32_4 = arith.constant 8 : i32
    %8 = arith.subi %c8_i32_4, %7 : i32
    %c8_i32_5 = arith.constant 8 : i32
    %9 = arith.minsi %c8_i32_5, %8 : i32
    %c0_6 = arith.constant 0 : index
    %c0_7 = arith.constant 0 : index
    %10 = vector.load %arg7[%c0_6, %c0_7] : memref<8x128xf32, #tpu.memory_space<vmem>>, vector<8x128xf32>
    %c0_i32_8 = arith.constant 0 : i32
    %11 = arith.subi %9, %c0_i32_8 : i32
    %12 = arith.addi %c0_i32_8, %11 : i32
    %c1_i32 = arith.constant 1 : i32
    %13 = scf.for %arg8 = %c0_i32_8 to %12 step %c1_i32 iter_args(%arg9 = %10) -> (vector<8x128xf32>)  : i32 {
      %18 = arith.index_cast %arg8 : i32 to index
      %c0_13 = arith.constant 0 : index
      %c0_14 = arith.constant 0 : index
      %19 = vector.load %arg1[%18, %c0_13, %c0_14] : memref<8x8x384xf32, #tpu.memory_space<vmem>>, vector<1x8x384xf32>
      %20 = vector.shape_cast %19 : vector<1x8x384xf32> to vector<8x384xf32>
      %cst = arith.constant dense<0.000000e+00> : vector<8x384xf32>
      %21 = tpu.matmul %arg9, %3, %cst {dimension_numbers = #tpu.dot_dimension_numbers<[1], [0], [0], [1], [0, 0, 1, 1], [], []>} : vector<8x128xf32>, vector<128x384xf32>, vector<8x384xf32> -> vector<8x384xf32>
      %22 = arith.addf %21, %6 : vector<8x384xf32>
      %23 = vector.extract_strided_slice %20 {offsets = [0, 0], sizes = [8, 128], strides = [1, 1]} : vector<8x384xf32> to vector<8x128xf32>
      %24 = vector.extract_strided_slice %22 {offsets = [0, 0], sizes = [8, 128], strides = [1, 1]} : vector<8x384xf32> to vector<8x128xf32>
      %25 = arith.addf %23, %24 : vector<8x128xf32>
      %26 = arith.negf %25 : vector<8x128xf32>
      %27 = math.exp %26 : vector<8x128xf32>
      %cst_15 = arith.constant 1.000000e+00 : f32
      %28 = vector.broadcast %cst_15 : f32 to vector<8x128xf32>
      %29 = arith.addf %28, %27 : vector<8x128xf32>
      %30 = arith.divf %28, %29 : vector<8x128xf32>
      %31 = vector.extract_strided_slice %20 {offsets = [0, 128], sizes = [8, 128], strides = [1, 1]} : vector<8x384xf32> to vector<8x128xf32>
      %32 = vector.extract_strided_slice %22 {offsets = [0, 128], sizes = [8, 128], strides = [1, 1]} : vector<8x384xf32> to vector<8x128xf32>
      %33 = arith.addf %31, %32 : vector<8x128xf32>
      %34 = arith.negf %33 : vector<8x128xf32>
      %35 = math.exp %34 : vector<8x128xf32>
      %cst_16 = arith.constant 1.000000e+00 : f32
      %36 = vector.broadcast %cst_16 : f32 to vector<8x128xf32>
      %37 = arith.addf %36, %35 : vector<8x128xf32>
      %38 = arith.divf %36, %37 : vector<8x128xf32>
      %39 = vector.extract_strided_slice %20 {offsets = [0, 256], sizes = [8, 128], strides = [1, 1]} : vector<8x384xf32> to vector<8x128xf32>
      %40 = vector.extract_strided_slice %22 {offsets = [0, 256], sizes = [8, 128], strides = [1, 1]} : vector<8x384xf32> to vector<8x128xf32>
      %41 = arith.mulf %30, %40 : vector<8x128xf32>
      %42 = arith.addf %39, %41 : vector<8x128xf32>
      %43 = math.tanh %42 : vector<8x128xf32>
      %cst_17 = arith.constant 1.000000e+00 : f32
      %44 = vector.broadcast %cst_17 : f32 to vector<8x128xf32>
      %45 = arith.subf %44, %38 : vector<8x128xf32>
      %46 = arith.mulf %45, %43 : vector<8x128xf32>
      %47 = arith.mulf %38, %arg9 : vector<8x128xf32>
      %48 = arith.addf %46, %47 : vector<8x128xf32>
      %49 = arith.index_cast %arg8 : i32 to index
      %c0_18 = arith.constant 0 : index
      %c0_19 = arith.constant 0 : index
      %50 = vector.load %arg5[%49, %c0_18, %c0_19] : memref<8x8x128xf32, #tpu.memory_space<vmem>>, vector<1x8x128xf32>
      %51 = vector.shape_cast %50 : vector<1x8x128xf32> to vector<8x128xf32>
      %52 = vector.shape_cast %48 : vector<8x128xf32> to vector<1x8x128xf32>
      tpu.vector_store %arg5[%49, %c0_18, %c0_19], %52 {strides = array<i32>} : memref<8x8x128xf32, #tpu.memory_space<vmem>>, vector<1x8x128xf32>,
      scf.yield %48 : vector<8x128xf32>
    }
    %c0_9 = arith.constant 0 : index
    %c0_10 = arith.constant 0 : index
    %14 = vector.load %arg7[%c0_9, %c0_10] : memref<8x128xf32, #tpu.memory_space<vmem>>, vector<8x128xf32>
    tpu.vector_store %arg7[%c0_9, %c0_10], %13 {strides = array<i32>} : memref<8x128xf32, #tpu.memory_space<vmem>>, vector<8x128xf32>,
    %c0_i32_11 = arith.constant 0 : i32
    %15 = arith.cmpi eq, %arg0, %c0_i32_11 : i32
    %16 = arith.extui %15 : i1 to i32
    %c0_i32_12 = arith.constant 0 : i32
    %17 = arith.cmpi ne, %16, %c0_i32_12 : i32
    scf.if %17 {
      %c0_13 = arith.constant 0 : index
      %c0_14 = arith.constant 0 : index
      %18 = vector.load %arg6[%c0_13, %c0_14] : memref<8x128xf32, #tpu.memory_space<vmem>>, vector<8x128xf32>
      tpu.vector_store %arg6[%c0_13, %c0_14], %13 {strides = array<i32>} : memref<8x128xf32, #tpu.memory_space<vmem>>, vector<8x128xf32>,
    } else {
    }
    return
  }
  func.func @transform_0(%arg0: i32) -> (i32, i32, i32) {
    %c0_i32 = arith.constant 0 : i32
    %c0_i32_0 = arith.constant 0 : i32
    %c0_i32_1 = arith.constant 0 : i32
    return %arg0, %c0_i32, %c0_i32_0 : i32, i32, i32
  }
  func.func @transform_1(%arg0: i32) -> (i32, i32) {
    %c0_i32 = arith.constant 0 : i32
    %c0_i32_0 = arith.constant 0 : i32
    %c0_i32_1 = arith.constant 0 : i32
    return %c0_i32, %c0_i32_0 : i32, i32
  }
  func.func @transform_2(%arg0: i32) -> (i32, i32) {
    %c0_i32 = arith.constant 0 : i32
    %c0_i32_0 = arith.constant 0 : i32
    %c0_i32_1 = arith.constant 0 : i32
    return %c0_i32, %c0_i32_0 : i32, i32
  }
  func.func @transform_3(%arg0: i32) -> (i32, i32) {
    %c0_i32 = arith.constant 0 : i32
    %c0_i32_0 = arith.constant 0 : i32
    %c0_i32_1 = arith.constant 0 : i32
    return %c0_i32, %c0_i32_0 : i32, i32
  }
  func.func @transform_4(%arg0: i32) -> (i32, i32, i32) {
    %c0_i32 = arith.constant 0 : i32
    %c0_i32_0 = arith.constant 0 : i32
    %c0_i32_1 = arith.constant 0 : i32
    return %arg0, %c0_i32, %c0_i32_0 : i32, i32, i32
  }
  func.func @transform_5(%arg0: i32) -> (i32, i32) {
    %c0_i32 = arith.constant 0 : i32
    %c0_i32_0 = arith.constant 0 : i32
    %c0_i32_1 = arith.constant 0 : i32
    return %c0_i32, %c0_i32_0 : i32, i32
  }
}

</mosaic_0001>

<llo_original>
// kernel: tpu_custom_call.1
$region0: #{tpu_custom_call.1}
  #allocation0 [shape = 'u32[]', space=smem, size = 0x4, offset = 0x4, fixed_abs, tag = 'smem constant byte address 0x4 - core index']
  #allocation1 [shape = 'u32[144,128]{1,0:T(1,128)}', space=vmem, size = 0x12000, scoped, tag = 'internal scratch']
  #allocation2 [shape = 'f32[8,128]{1,0:T(8,128)}', space=vmem, size = 0x1000, scoped, tag = 'scratch operand']
  %s0 = inlined_call_operand.hbm [shape: f32[8,8,384], index: 0, kind: input, shape index: {}]
  %s1 = inlined_call_operand.hbm [shape: f32[8,128], index: 1, kind: input, shape index: {}]
  %s2 = inlined_call_operand.hbm [shape: f32[128,384], index: 2, kind: input, shape index: {}]
  %s3 = inlined_call_operand.vmem [shape: f32[1,384], index: 3, kind: input, shape index: {}]
  %s4 = inlined_call_operand.hbm [shape: f32[8,8,128], index: 4, kind: output, shape index: {0}]
  %s5 = inlined_call_operand.hbm [shape: f32[8,128], index: 5, kind: output, shape index: {1}]
  %6 = xla_tuple %s4, %s5
  %s7 = sld [smem:[#allocation0]]
  $region61: #{tpu_custom_call.1} parent=0
    _
  %s9 = ssub.s32 1, %s7
  %s10 = scalar_select 0, %s9, %s7
  $region1: #{tpu_custom_call.1} parent=0
    #allocation3 [shape = 'u8[98304]{0}', space=vmem, size = 0x18000, scoped, tag = 'input window, operand 0, single buffered']
    #allocation4 [shape = 's32[1]{0}', space=sflag, size = 0x4, scoped, tag = 'scoped memory for tpu_custom_call.1']
    #allocation5 [shape = 's32[1]{0}', space=sflag, size = 0x4, scoped, tag = 'scoped memory for tpu_custom_call.1']
    #allocation6 [shape = 'u8[4096]{0}', space=vmem, size = 0x1000, scoped, tag = 'input window, operand 1, single buffered']
    #allocation7 [shape = 's32[1]{0}', space=sflag, size = 0x4, scoped, tag = 'scoped memory for tpu_custom_call.1']
    #allocation8 [shape = 'u8[196608]{0}', space=vmem, size = 0x30000, scoped, tag = 'input window, operand 2, single buffered']
    #allocation9 [shape = 'u8[32768]{0}', space=vmem, size = 0x8000, scoped, tag = 'output window, operand 0, single buffered']
    #allocation10 [shape = 'u8[4096]{0}', space=vmem, size = 0x1000, scoped, tag = 'output window, operand 1, single buffered']
    #allocation11 [shape = 's32[1]{0}', space=sflag, size = 0x4, scoped, tag = 'scoped memory for tpu_custom_call.1']
    %11 = vsyncpa [#allocation4], 0
    %12 = vsyncpa [#allocation7], 0
    %13 = vsyncpa [#allocation5], 0
    %14 = vsyncpa [#allocation11], 0
    // Predicated region
    $region2: #{tpu_custom_call.1} parent=1 // pred_check
      _
    $region3: #{tpu_custom_call.1} parent=1 // pred_check_branch
      %16 = sbr.rel (0) target = $region5
    $region4: #{tpu_custom_call.1} parent=1 // pred_region
      %s18 = ssub.s32 3072, 3072
      %19 = vsyncadd [#allocation4], %s18
      %s20 = sshll.u32 [#allocation3], 4
      %s21 = int_to_ptr.vmem [resolvable:$true] %s20
      %26 = dma.hbm_to_vmem [thread:$0]  %s0, 3072, %s21, [#allocation4], 384, 384, 24
    $region5: #{tpu_custom_call.1} parent=1 // pred_fallthru
      _
    // Predicated region
    $region6: #{tpu_custom_call.1} parent=1 // pred_check
      _
    $region7: #{tpu_custom_call.1} parent=1 // pred_check_branch
      %28 = sbr.rel (0) target = $region9
    $region8: #{tpu_custom_call.1} parent=1 // pred_region
      %s30 = ssub.s32 128, 128
      %31 = vsyncadd [#allocation7], %s30
      %s33 = sshll.u32 [#allocation6], 4
      %s34 = int_to_ptr.vmem [resolvable:$true] %s33
      %36 = dma.hbm_to_vmem [thread:$0]  %s1, 128, %s34, [#allocation7]
    $region9: #{tpu_custom_call.1} parent=1 // pred_fallthru
      _
    // Predicated region
    $region10: #{tpu_custom_call.1} parent=1 // pred_check
      _
    $region11: #{tpu_custom_call.1} parent=1 // pred_check_branch
      %38 = sbr.rel (0) target = $region13
    $region12: #{tpu_custom_call.1} parent=1 // pred_region
      %s40 = ssub.s32 6144, 6144
      %41 = vsyncadd [#allocation7], %s40
      %s42 = sshll.u32 [#allocation8], 4
      %s43 = int_to_ptr.vmem [resolvable:$true] %s42
      %48 = dma.hbm_to_vmem [thread:$0]  %s2, 6144, %s43, [#allocation7], 384, 384, 24
    $region13: #{tpu_custom_call.1} parent=1 // pred_fallthru
      _
    // Predicated region
    $region14: #{tpu_custom_call.1} parent=1 // pred_check
      _
    $region15: #{tpu_custom_call.1} parent=1 // pred_check_branch
      %50 = sbr.rel (0) target = $region17
    $region16: #{tpu_custom_call.1} parent=1 // pred_region
      _
    $region17: #{tpu_custom_call.1} parent=1 // pred_fallthru
      _
    // Predicated region
    $region18: #{tpu_custom_call.1} parent=1 // pred_check
      _
    $region19: #{tpu_custom_call.1} parent=1 // pred_check_branch
      %52 = sbr.rel (0) target = $region21
    $region20: #{tpu_custom_call.1} parent=1 // pred_region
      %53 = dma.done [#allocation4], 3072
    $region21: #{tpu_custom_call.1} parent=1 // pred_fallthru
      _
    // Predicated region
    $region22: #{tpu_custom_call.1} parent=1 // pred_check
      _
    $region23: #{tpu_custom_call.1} parent=1 // pred_check_branch
      %55 = sbr.rel (0) target = $region25
    $region24: #{tpu_custom_call.1} parent=1 // pred_region
      %56 = dma.done [#allocation7], 128
    $region25: #{tpu_custom_call.1} parent=1 // pred_fallthru
      _
    // Predicated region
    $region26: #{tpu_custom_call.1} parent=1 // pred_check
      _
    $region27: #{tpu_custom_call.1} parent=1 // pred_check_branch
      %58 = sbr.rel (0) target = $region29
    $region28: #{tpu_custom_call.1} parent=1 // pred_region
      %59 = dma.done [#allocation7], 6144
    $region29: #{tpu_custom_call.1} parent=1 // pred_fallthru
      _
    %p60 = scmp.eq.s32.totalorder 0, 0
    // Predicated region
    $region30: #{tpu_custom_call.1} parent=1 // pred_check
      %p61 = pneg %p60
    $region31: #{tpu_custom_call.1} parent=1 // pred_check_branch
      %63 = sbr.rel (%p61) target = $region33
    $region32: #{tpu_custom_call.1} parent=1 // pred_region
      %v64 = vld [vmem:[#allocation6] sm:$0xff]
      %65 = vst [vmem:[#allocation2] sm:$0xff] %v64
    $region33: #{tpu_custom_call.1} parent=1 // pred_fallthru
      _
    %v66 = vld [vmem:[#allocation8] sm:$0xff]
    %v67 = vld [vmem:[#allocation8 + $0x8] sm:$0xff]
    %v68 = vld [vmem:[#allocation8 + $0x10] sm:$0xff]
    %v69 = vld [vmem:[#allocation8 + $0x18] sm:$0xff]
    %v70 = vld [vmem:[#allocation8 + $0x20] sm:$0xff]
    %v71 = vld [vmem:[#allocation8 + $0x28] sm:$0xff]
    %v72 = vld [vmem:[#allocation8 + $0x30] sm:$0xff]
    %v73 = vld [vmem:[#allocation8 + $0x38] sm:$0xff]
    %v74 = vld [vmem:[#allocation8 + $0x40] sm:$0xff]
    %v75 = vld [vmem:[#allocation8 + $0x48] sm:$0xff]
    %v76 = vld [vmem:[#allocation8 + $0x50] sm:$0xff]
    %v77 = vld [vmem:[#allocation8 + $0x58] sm:$0xff]
    %v78 = vld [vmem:[#allocation8 + $0x60] sm:$0xff]
    %v79 = vld [vmem:[#allocation8 + $0x68] sm:$0xff]
    %v80 = vld [vmem:[#allocation8 + $0x70] sm:$0xff]
    %v81 = vld [vmem:[#allocation8 + $0x78] sm:$0xff]
    %v82 = vld [vmem:[#allocation8 + $0x80] sm:$0xff]
    %v83 = vld [vmem:[#allocation8 + $0x88] sm:$0xff]
    %v84 = vld [vmem:[#allocation8 + $0x90] sm:$0xff]
    %v85 = vld [vmem:[#allocation8 + $0x98] sm:$0xff]
    %v86 = vld [vmem:[#allocation8 + $0xa0] sm:$0xff]
    %v87 = vld [vmem:[#allocation8 + $0xa8] sm:$0xff]
    %v88 = vld [vmem:[#allocation8 + $0xb0] sm:$0xff]
    %v89 = vld [vmem:[#allocation8 + $0xb8] sm:$0xff]
    %v90 = vld [vmem:[#allocation8 + $0xc0] sm:$0xff]
    %v91 = vld [vmem:[#allocation8 + $0xc8] sm:$0xff]
    %v92 = vld [vmem:[#allocation8 + $0xd0] sm:$0xff]
    %v93 = vld [vmem:[#allocation8 + $0xd8] sm:$0xff]
    %v94 = vld [vmem:[#allocation8 + $0xe0] sm:$0xff]
    %v95 = vld [vmem:[#allocation8 + $0xe8] sm:$0xff]
    %v96 = vld [vmem:[#allocation8 + $0xf0] sm:$0xff]
    %v97 = vld [vmem:[#allocation8 + $0xf8] sm:$0xff]
    %v98 = vld [vmem:[#allocation8 + $0x100] sm:$0xff]
    %v99 = vld [vmem:[#allocation8 + $0x108] sm:$0xff]
    %v100 = vld [vmem:[#allocation8 + $0x110] sm:$0xff]
    %v101 = vld [vmem:[#allocation8 + $0x118] sm:$0xff]
    %v102 = vld [vmem:[#allocation8 + $0x120] sm:$0xff]
    %v103 = vld [vmem:[#allocation8 + $0x128] sm:$0xff]
    %v104 = vld [vmem:[#allocation8 + $0x130] sm:$0xff]
    %v105 = vld [vmem:[#allocation8 + $0x138] sm:$0xff]
    %v106 = vld [vmem:[#allocation8 + $0x140] sm:$0xff]
    %v107 = vld [vmem:[#allocation8 + $0x148] sm:$0xff]
    %v108 = vld [vmem:[#allocation8 + $0x150] sm:$0xff]
    %v109 = vld [vmem:[#allocation8 + $0x158] sm:$0xff]
    %v110 = vld [vmem:[#allocation8 + $0x160] sm:$0xff]
    %v111 = vld [vmem:[#allocation8 + $0x168] sm:$0xff]
    %v112 = vld [vmem:[#allocation8 + $0x170] sm:$0xff]
    %v113 = vld [vmem:[#allocation8 + $0x178] sm:$0xff]
    %v114 = vld [vmem:[%s3] sm:$0x7]
    %v116 = vlaneseq
    %v117 = vshrl.u32 %v116, 7
    %v118 = vsub.s32 0, %v117
    %v119 = vrot.slane %v114, %v118
    %v120 = vlaneseq
    %v121 = vshrl.u32 %v120, 7
    %v122 = vsub.s32 1, %v121
    %v123 = vrot.slane %v114, %v122
    %v124 = vlaneseq
    %v125 = vshrl.u32 %v124, 7
    %v126 = vsub.s32 2, %v125
    %v127 = vrot.slane %v114, %v126
    %s131 = smul.u32 0, 8
    %s132 = ssub.s32 8, %s131
    %p133 = scmp.lt.s32.totalorder %s132, 8
    %s134 = scalar_select %p133, %s132, 8
    %v135 = vld [vmem:[#allocation2] sm:$0xff]
    // While loop
    $region34: #{tpu_custom_call.1} parent=1 // loop_pre_header
      _
    $region35: #{tpu_custom_call.1} parent=1 // loop_header
      %s137 = sphi 0, %s139
      %p138 = scmp.ge.s32.totalorder %s137, %s134
      %v142 = vphi %v135, %v310
    $region36: #{tpu_custom_call.1} parent=1 // loop_header_branch
      %141 = sbr.rel (%p138) target = $region40
    $region37: #{tpu_custom_call.1} parent=1 // loop_body
      %s143 = smul.u32 %s137, 3
      %s144 = smul.addr %s143, 8
      %s145 = scalar_lea.vmem [#allocation3], %s144
      %v146 = vld [vmem:[%s145] sm:$0xff]
      %v147 = vld [vmem:[%s145 + $0x8] sm:$0xff]
      %v148 = vld [vmem:[%s145 + $0x10] sm:$0xff]
      %149 = vmatprep.subr.mxu0 %v67
      %150 = vmatpush1.msra.mxu0 %v66
      %151 = vmatprep.subr.mxu0 %v70
      %152 = vmatpush1.msra.mxu0 %v69
      %153 = vmatprep.subr.mxu0 %v73
      %154 = vmatpush1.msra.mxu0 %v72
      %155 = vmatprep.subr.mxu0 %v76
      %156 = vmatpush1.msra.mxu0 %v75
      %157 = vmatprep.subr.mxu0 %v79
      %158 = vmatpush1.msra.mxu0 %v78
      %159 = vmatprep.subr.mxu0 %v82
      %160 = vmatpush1.msra.mxu0 %v81
      %161 = vmatprep.subr.mxu0 %v85
      %162 = vmatpush1.msra.mxu0 %v84
      %163 = vmatprep.subr.mxu0 %v88
      %164 = vmatpush1.msra.mxu0 %v87
      %165 = vmatprep.subr.mxu0 %v91
      %166 = vmatpush1.msra.mxu0 %v90
      %167 = vmatprep.subr.mxu0 %v94
      %168 = vmatpush1.msra.mxu0 %v93
      %169 = vmatprep.subr.mxu0 %v97
      %170 = vmatpush1.msra.mxu0 %v96
      %171 = vmatprep.subr.mxu0 %v100
      %172 = vmatpush1.msra.mxu0 %v99
      %173 = vmatprep.subr.mxu0 %v103
      %174 = vmatpush1.msra.mxu0 %v102
      %175 = vmatprep.subr.mxu0 %v106
      %176 = vmatpush1.msra.mxu0 %v105
      %177 = vmatprep.subr.mxu0 %v109
      %178 = vmatpush1.msra.mxu0 %v108
      %179 = vmatprep.subr.mxu0 %v112
      %180 = vmatpush1.msra.mxu0 %v111
      %181 = vmatprep.subr.mxu0 0.0
      %182 = vmatpush1.msra.mxu0 0.0
      %183 = vmatprep.subr.mxu0 0.0
      %184 = vmatpush1.msra.mxu0 0.0
      %185 = vmatprep.subr.mxu0 0.0
      %186 = vmatpush1.msra.mxu0 0.0
      %187 = vmatprep.subr.mxu0 0.0
      %188 = vmatpush1.msra.mxu0 0.0
      %189 = vmatprep.subr.mxu0 0.0
      %190 = vmatpush1.msra.mxu0 0.0
      %191 = vmatprep.subr.mxu0 0.0
      %192 = vmatpush1.msra.mxu0 0.0
      %193 = vmatprep.subr.mxu0 0.0
      %194 = vmatpush1.msra.mxu0 0.0
      %195 = vmatprep.subr.mxu0 0.0
      %196 = vmatpush1.msra.mxu0 0.0
      %197 = vmatprep.subr.mxu0 0.0
      %198 = vmatpush1.msra.mxu0 0.0
      %199 = vmatprep.subr.mxu0 0.0
      %200 = vmatpush1.msra.mxu0 0.0
      %201 = vmatprep.subr.mxu0 0.0
      %202 = vmatpush1.msra.mxu0 0.0
      %203 = vmatprep.subr.mxu0 0.0
      %204 = vmatpush1.msra.mxu0 0.0
      %205 = vmatprep.subr.mxu0 0.0
      %206 = vmatpush1.msra.mxu0 0.0
      %207 = vmatprep.subr.mxu0 0.0
      %208 = vmatpush1.msra.mxu0 0.0
      %209 = vmatprep.subr.mxu0 0.0
      %210 = vmatpush1.msra.mxu0 0.0
      %211 = vmatprep.subr.mxu0 0.0
      %212 = vmatpush1.msra.mxu0 0.0
      %213 = vmatprep.mubr.f32.mxu0 0.0
      %214 = vmatmul.mubr.f32.gmra.mrb[0].mxu0 %v142
      %v215 = vpop.f32.mrb[0].mxu0
      %v216 = vadd.f32 %v119, %v215
      %v217 = vpop.f32.mrb[0].mxu0
      %v218 = vadd.f32 %v123, %v217
      %219 = vdwg.mxu0
      %220 = vmatprep.subr.mxu0 0.0
      %221 = vmatpush1.msra.mxu0 %v68
      %222 = vmatprep.subr.mxu0 0.0
      %223 = vmatpush1.msra.mxu0 %v71
      %224 = vmatprep.subr.mxu0 0.0
      %225 = vmatpush1.msra.mxu0 %v74
      %226 = vmatprep.subr.mxu0 0.0
      %227 = vmatpush1.msra.mxu0 %v77
      %228 = vmatprep.subr.mxu0 0.0
      %229 = vmatpush1.msra.mxu0 %v80
      %230 = vmatprep.subr.mxu0 0.0
      %231 = vmatpush1.msra.mxu0 %v83
      %232 = vmatprep.subr.mxu0 0.0
      %233 = vmatpush1.msra.mxu0 %v86
      %234 = vmatprep.subr.mxu0 0.0
      %235 = vmatpush1.msra.mxu0 %v89
      %236 = vmatprep.subr.mxu0 0.0
      %237 = vmatpush1.msra.mxu0 %v92
      %238 = vmatprep.subr.mxu0 0.0
      %239 = vmatpush1.msra.mxu0 %v95
      %240 = vmatprep.subr.mxu0 0.0
      %241 = vmatpush1.msra.mxu0 %v98
      %242 = vmatprep.subr.mxu0 0.0
      %243 = vmatpush1.msra.mxu0 %v101
      %244 = vmatprep.subr.mxu0 0.0
      %245 = vmatpush1.msra.mxu0 %v104
      %246 = vmatprep.subr.mxu0 0.0
      %247 = vmatpush1.msra.mxu0 %v107
      %248 = vmatprep.subr.mxu0 0.0
      %249 = vmatpush1.msra.mxu0 %v110
      %250 = vmatprep.subr.mxu0 0.0
      %251 = vmatpush1.msra.mxu0 %v113
      %252 = vmatprep.subr.mxu0 0.0
      %253 = vmatpush1.msra.mxu0 0.0
      %254 = vmatprep.subr.mxu0 0.0
      %255 = vmatpush1.msra.mxu0 0.0
      %256 = vmatprep.subr.mxu0 0.0
      %257 = vmatpush1.msra.mxu0 0.0
      %258 = vmatprep.subr.mxu0 0.0
      %259 = vmatpush1.msra.mxu0 0.0
      %260 = vmatprep.subr.mxu0 0.0
      %261 = vmatpush1.msra.mxu0 0.0
      %262 = vmatprep.subr.mxu0 0.0
      %263 = vmatpush1.msra.mxu0 0.0
      %264 = vmatprep.subr.mxu0 0.0
      %265 = vmatpush1.msra.mxu0 0.0
      %266 = vmatprep.subr.mxu0 0.0
      %267 = vmatpush1.msra.mxu0 0.0
      %268 = vmatprep.subr.mxu0 0.0
      %269 = vmatpush1.msra.mxu0 0.0
      %270 = vmatprep.subr.mxu0 0.0
      %271 = vmatpush1.msra.mxu0 0.0
      %272 = vmatprep.subr.mxu0 0.0
      %273 = vmatpush1.msra.mxu0 0.0
      %274 = vmatprep.subr.mxu0 0.0
      %275 = vmatpush1.msra.mxu0 0.0
      %276 = vmatprep.subr.mxu0 0.0
      %277 = vmatpush1.msra.mxu0 0.0
      %278 = vmatprep.subr.mxu0 0.0
      %279 = vmatpush1.msra.mxu0 0.0
      %280 = vmatprep.subr.mxu0 0.0
      %281 = vmatpush1.msra.mxu0 0.0
      %282 = vmatprep.subr.mxu0 0.0
      %283 = vmatpush1.msra.mxu0 0.0
      %284 = vmatprep.mubr.f32.mxu0 0.0
      %285 = vmatmul.mubr.f32.gmra.mrb[0].mxu0 %v142
      %v286 = vpop.f32.mrb[0].mxu0
      %v287 = vadd.f32 %v127, %v286
      %v288 = vpop.f32.mrb[0].mxu0
      %289 = vdwg.mxu0
      %v290 = vadd.f32 %v146, %v216
      %v291 = vxor.u32 %v290, 2147483648
      %v292 = vmul.f32 %v291, 1.442695
      %v293 = vpow.pop %v292
      %v294 = vadd.f32 %v293, 1.0
      %v295 = vrcp.pop %v294
      %v296 = vmul.f32 1.0, %v295
      %v297 = vadd.f32 %v147, %v218
      %v298 = vxor.u32 %v297, 2147483648
      %v299 = vmul.f32 %v298, 1.442695
      %v300 = vpow.pop %v299
      %v301 = vadd.f32 %v300, 1.0
      %v302 = vrcp.pop %v301
      %v303 = vmul.f32 1.0, %v302
      %v304 = vmul.f32 %v296, %v287
      %v305 = vadd.f32 %v148, %v304
      %v306 = vtanh.pop %v305
      %v307 = vsub.f32 1.0, %v303
      %v308 = vmul.f32 %v307, %v306
      %v309 = vmul.f32 %v303, %v142
      %v310 = vadd.f32 %v308, %v309
      %s311 = smul.u32 %s137, 8
      %s312 = scalar_lea.vmem [#allocation9], %s311
      %313 = vst [vmem:[%s312] sm:$0xff] %v310
    $region38: #{tpu_custom_call.1} parent=1 // loop_footer
      %s139 = sadd.s32 %s137, 1
    $region39: #{tpu_custom_call.1} parent=1 // loop_footer_branch
      %136 = sbr.rel target = $region35
    $region40: #{tpu_custom_call.1} parent=1 // loop_exit
      _
    %314 = vst [vmem:[#allocation2] sm:$0xff] %v142
    // Predicated region
    $region41: #{tpu_custom_call.1} parent=1 // pred_check
      %p315 = pneg %p60
    $region42: #{tpu_custom_call.1} parent=1 // pred_check_branch
      %317 = sbr.rel (%p315) target = $region44
    $region43: #{tpu_custom_call.1} parent=1 // pred_region
      %318 = vst [vmem:[#allocation10] sm:$0xff] %v142
    $region44: #{tpu_custom_call.1} parent=1 // pred_fallthru
      _
    // Predicated region
    $region45: #{tpu_custom_call.1} parent=1 // pred_check
      _
    $region46: #{tpu_custom_call.1} parent=1 // pred_check_branch
      %320 = sbr.rel (0) target = $region48
    $region47: #{tpu_custom_call.1} parent=1 // pred_region
      %s322 = ssub.s32 1024, 1024
      %323 = vsyncadd [#allocation5], %s322
      %s324 = sshll.u32 [#allocation9], 4
      %s325 = int_to_ptr.vmem [resolvable:$true] %s324
      %330 = dma.vmem_to_hbm [thread:$0]  %s325, 1024, %s4, [#allocation5], 128, 128, 8
    $region48: #{tpu_custom_call.1} parent=1 // pred_fallthru
      _
    // Predicated region
    $region49: #{tpu_custom_call.1} parent=1 // pred_check
      _
    $region50: #{tpu_custom_call.1} parent=1 // pred_check_branch
      %332 = sbr.rel (0) target = $region52
    $region51: #{tpu_custom_call.1} parent=1 // pred_region
      %s334 = ssub.s32 128, 128
      %335 = vsyncadd [#allocation11], %s334
      %s337 = sshll.u32 [#allocation10], 4
      %s338 = int_to_ptr.vmem [resolvable:$true] %s337
      %340 = dma.vmem_to_hbm [thread:$0]  %s338, 128, %s5, [#allocation11]
    $region52: #{tpu_custom_call.1} parent=1 // pred_fallthru
      _
    // Predicated region
    $region53: #{tpu_custom_call.1} parent=1 // pred_check
      _
    $region54: #{tpu_custom_call.1} parent=1 // pred_check_branch
      %342 = sbr.rel (0) target = $region56
    $region55: #{tpu_custom_call.1} parent=1 // pred_region
      %343 = dma.done [#allocation5], 1024
    $region56: #{tpu_custom_call.1} parent=1 // pred_fallthru
      _
    // Predicated region
    $region57: #{tpu_custom_call.1} parent=1 // pred_check
      _
    $region58: #{tpu_custom_call.1} parent=1 // pred_check_branch
      %345 = sbr.rel (0) target = $region60
    $region59: #{tpu_custom_call.1} parent=1 // pred_region
      %346 = dma.done [#allocation11], 128
    $region60: #{tpu_custom_call.1} parent=1 // pred_fallthru
      _
    %347 = vsyncpa [#allocation4], 1
    %348 = vsyncpa [#allocation7], 1
    %349 = vsyncpa [#allocation5], 1
    %350 = vsyncpa [#allocation11], 1

</llo_original>
